<compile_context>
chip_gen: v7x
topology: tpu7x:2x2x1
jax: 0.10.0
libtpu: 0.0.40
codegen_flags: <defaults>
</compile_context>

<pallas_src>
import jax
import jax.numpy as jnp
from jax.experimental import pallas as pl
from jax.experimental.pallas import tpu as pltpu

MAX_LEN = 16          # global `max_len` (fc1 input width)
MAX_POS = 8           # global `max_pos` (fc3 input width)


def dnn_kernel(x_ref, xm_ref, wtop_ref, btop_ref, wbot_ref, bbot_ref,
               wh1_ref, wh2_ref, bhead_ref, out_ref):
    # fused conv1 + fc1 (+ ReLU): (TB, 2L) @ (2L, 128)
    # TODO(synk): dropout(0.2)/dropout(0.1) implemented as identity (eval mode).
    h1 = jnp.maximum(
        jnp.dot(x_ref[...], wtop_ref[...], preferred_element_type=jnp.float32)
        + btop_ref[...], 0.0)                                     # (TB, 128)
    # fused conv2 + fc3 (+ ReLU): (TB, 2P) @ (2P, 16)
    h2 = jnp.maximum(
        jnp.dot(xm_ref[...], wbot_ref[...], preferred_element_type=jnp.float32)
        + bbot_ref[...], 0.0)                                     # (TB, 16)
    # folded fc2/fc4/fc5 head as VPU multiply + lane reduction (N=1 output)
    z = (jnp.sum(h1 * wh1_ref[...], axis=-1, keepdims=True)
         + jnp.sum(h2 * wh2_ref[...], axis=-1, keepdims=True)
         + bhead_ref[0])                                          # (TB, 1)
    out_ref[...] = jnp.maximum(z, 0.0)                            # final ReLU


def init_params(key):
    ks = jax.random.split(key, 12)
    s = 0.1
    p = {
        # conv1: Conv1d(2, 1, 1) -> weight (1,2,1) stored as (2,), bias (1,)
        "c1w": jax.random.normal(ks[0], (2,), jnp.float32) * s,
        "c1b": jax.random.normal(ks[1], (1,), jnp.float32) * s,
        # fc1: Linear(MAX_LEN, 128) -> weight (128, MAX_LEN), bias (128,)
        "w1": jax.random.normal(ks[2], (128, MAX_LEN), jnp.float32) * s,
        "b1": jax.random.normal(ks[3], (128,), jnp.float32) * s,
        # fc2: Linear(128, 4)
        "w2": jax.random.normal(ks[4], (4, 128), jnp.float32) * s,
        "b2": jax.random.normal(ks[5], (4,), jnp.float32) * s,
        # conv2: Conv1d(2, 1, 1)
        "c2w": jax.random.normal(ks[6], (2,), jnp.float32) * s,
        "c2b": jax.random.normal(ks[7], (1,), jnp.float32) * s,
        # fc3: Linear(MAX_POS, 16)
        "w3": jax.random.normal(ks[8], (16, MAX_POS), jnp.float32) * s,
        "b3": jax.random.normal(ks[9], (16,), jnp.float32) * s,
        # fc4: Linear(16, 4)
        "w4": jax.random.normal(ks[10], (4, 16), jnp.float32) * s,
        "b4": jax.random.normal(ks[11], (4,), jnp.float32) * s,
        # fc5: Linear(8, 1)
        "w5": jax.random.normal(jax.random.fold_in(key, 100), (1, 8), jnp.float32) * s,
        "b5": jax.random.normal(jax.random.fold_in(key, 101), (1,), jnp.float32) * s,
    }
    return p


def fold_params(p):
    """Exact algebraic fold (up to FP reassociation), done ONCE and reused.

    conv1/conv2 (kernel_size=1 pointwise channel mixes) fold into fc1/fc3;
    conv biases propagate through the fc column sums.  fc2/fc4/fc5 is an
    all-linear chain and folds into one head row per branch + a scalar bias.
    """
    L, P = MAX_LEN, MAX_POS
    w1T = p["w1"].T                          # (L, 128)
    w3T = p["w3"].T                          # (P, 16)
    c1w, c1b = p["c1w"], p["c1b"][0]
    c2w, c2b = p["c2w"], p["c2b"][0]

    # fused first-layer weights; input rows are [x_ch0 | x_ch1] / [m_ch0 | m_ch1]
    wtop = jnp.concatenate([c1w[0] * w1T, c1w[1] * w1T], axis=0)   # (2L, 128)
    wbot = jnp.concatenate([c2w[0] * w3T, c2w[1] * w3T], axis=0)   # (2P, 16)
    btop = (p["b1"] + c1b * jnp.sum(w1T, axis=0)).reshape(1, 128)
    bbot = (p["b3"] + c2b * jnp.sum(w3T, axis=0)).reshape(1, 16)

    # fold fc2/fc4/fc5 into one head row per branch + scalar bias
    w5T = p["w5"].T                                                # (8, 1)
    w5a, w5b = w5T[:4, :], w5T[4:, :]
    wh1 = (p["w2"].T @ w5a).reshape(1, 128)                        # (1, 128)
    wh2 = (p["w4"].T @ w5b).reshape(1, 16)                         # (1, 16)
    bhead = (jnp.dot(p["b2"], w5a[:, 0])
             + jnp.dot(p["b4"], w5b[:, 0])
             + p["b5"][0]).reshape(1)                              # (1,) scalar
    return dict(wtop=wtop, btop=btop, wbot=wbot, bbot=bbot,
                wh1=wh1, wh2=wh2, bhead=bhead)


def _round_up(x, m):
    return (x + m - 1) // m * m


def dnn_forward(inputs, inputs_mod, folded, *, block_b=8192):
    """inputs: (B, 2, MAX_LEN) NCW; inputs_mod: (B, 2, MAX_POS) NCW."""
    B = inputs.shape[0]
    L, P = MAX_LEN, MAX_POS

    # plain-JAX glue: contiguous channel-major slabs (free reshapes, no concat)
    x = inputs.reshape(B, 2 * L)
    xm = inputs_mod.reshape(B, 2 * P)

    # batch tile: multiple of 8 sublanes, defensively rounded
    TB = min(_round_up(block_b, 8), _round_up(B, 8))
    # keep >= 2 grid steps on big batches so the "parallel" batch axis can
    # split across v7x's two TensorCores (no-op on v5e/v6e)
    if TB >= B and B >= 4096:
        TB = _round_up((B + 1) // 2, 8)
    grid = (pl.cdiv(B, TB),)

    flops = 2 * B * (2 * L * 128 + 2 * P * 16 + 128 + 16)
    bytes_accessed = 4 * (B * (2 * L + 2 * P + 1)
                          + 2 * L * 128 + 2 * P * 16 + 2 * 128 + 2 * 16 + 1)

    return pl.pallas_call(
        dnn_kernel,
        out_shape=jax.ShapeDtypeStruct((B, 1), jnp.float32),
        grid=grid,
        in_specs=[
            pl.BlockSpec((TB, 2 * L), lambda i: (i, 0)),       # x slab, batch-tiled
            pl.BlockSpec((TB, 2 * P), lambda i: (i, 0)),       # xmod slab, batch-tiled
            pl.BlockSpec((2 * L, 128), lambda i: (0, 0)),      # conv1+fc1 weight (resident)
            pl.BlockSpec((1, 128), lambda i: (0, 0)),          # conv1+fc1 bias
            pl.BlockSpec((2 * P, 16), lambda i: (0, 0)),       # conv2+fc3 weight (resident)
            pl.BlockSpec((1, 16), lambda i: (0, 0)),           # conv2+fc3 bias
            pl.BlockSpec((1, 128), lambda i: (0, 0)),          # folded head weight (branch 1)
            pl.BlockSpec((1, 16), lambda i: (0, 0)),           # folded head weight (branch 2)
            pl.BlockSpec(memory_space=pltpu.MemorySpace.SMEM), # scalar head bias in SMEM
        ],
        out_specs=pl.BlockSpec((TB, 1), lambda i: (i, 0)),
        compiler_params=pltpu.CompilerParams(
            dimension_semantics=("parallel",)),
        cost_estimate=pl.CostEstimate(
            flops=flops, transcendentals=0, bytes_accessed=bytes_accessed),
    )(x, xm, folded["wtop"], folded["btop"], folded["wbot"], folded["bbot"],
      folded["wh1"], folded["wh2"], folded["bhead"])


def dnn_reference(inputs, inputs_mod, p):
    """Pure-JAX reference matching the PyTorch forward (eval mode)."""
    x = jnp.einsum("bcl,c->bl", inputs, p["c1w"]) + p["c1b"][0]
    h = jax.nn.relu(x @ p["w1"].T + p["b1"])
    y = h @ p["w2"].T + p["b2"]
    xm = jnp.einsum("bcl,c->bl", inputs_mod, p["c2w"]) + p["c2b"][0]
    hm = jax.nn.relu(xm @ p["w3"].T + p["b3"])
    ym = hm @ p["w4"].T + p["b4"]
    cat = jnp.concatenate([y, ym], axis=1)
    return jax.nn.relu(cat @ p["w5"].T + p["b5"])


if __name__ == "__main__":
    key = jax.random.PRNGKey(0)
    k_in, k_mod, k_par = jax.random.split(key, 3)

    B = 24
    inputs = jax.random.normal(k_in, (B, 2, MAX_LEN), jnp.float32)
    inputs_mod = jax.random.normal(k_mod, (B, 2, MAX_POS), jnp.float32)
    params = init_params(k_par)
    folded = fold_params(params)   # hoisted: folded once, reused across calls

    # small block_b so the test exercises a multi-step batch grid (grid=(3,))
    out = dnn_forward(inputs, inputs_mod, folded, block_b=8)
    out = jax.block_until_ready(out)

    ref = dnn_reference(inputs, inputs_mod, params)
    assert out.shape == (B, 1)
    assert jnp.allclose(out, ref, atol=1e-4, rtol=1e-4), (out, ref)

    print("KERNEL_OK")
</pallas_src>

<mosaic_0001>
module attributes {stable_mosaic.version = 11 : i64} {
  func.func @dnn_kernel(%arg0: i32, %arg1: memref<8x32xf32, #tpu.memory_space<vmem>>, %arg2: memref<8x16xf32, #tpu.memory_space<vmem>>, %arg3: memref<32x128xf32, #tpu.memory_space<vmem>>, %arg4: memref<1x128xf32, #tpu.memory_space<vmem>>, %arg5: memref<16x16xf32, #tpu.memory_space<vmem>>, %arg6: memref<1x16xf32, #tpu.memory_space<vmem>>, %arg7: memref<1x128xf32, #tpu.memory_space<vmem>>, %arg8: memref<1x16xf32, #tpu.memory_space<vmem>>, %arg9: memref<1xf32, #tpu.memory_space<smem>>, %arg10: memref<8x1xf32, #tpu.memory_space<vmem>>) attributes {dimension_semantics = [#tpu.dimension_semantics<parallel>], iteration_bounds = array<i64: 3>, scalar_prefetch = 0 : i64, scratch_operands = 0 : i64, tpu.core_type = #tpu.core_type<tc>, window_params = [{transform_indices = @transform_0, window_bounds = array<i64: 8, 32>}, {transform_indices = @transform_1, window_bounds = array<i64: 8, 16>}, {pipeline_mode = #tpu.pipeline_mode<synchronous>, transform_indices = @transform_2, window_bounds = array<i64: 32, 128>}, {pipeline_mode = #tpu.pipeline_mode<synchronous>, transform_indices = @transform_3, window_bounds = array<i64: 1, 128>}, {pipeline_mode = #tpu.pipeline_mode<synchronous>, transform_indices = @transform_4, window_bounds = array<i64: 16, 16>}, {pipeline_mode = #tpu.pipeline_mode<synchronous>, transform_indices = @transform_5, window_bounds = array<i64: 1, 16>}, {pipeline_mode = #tpu.pipeline_mode<synchronous>, transform_indices = @transform_6, window_bounds = array<i64: 1, 128>}, {pipeline_mode = #tpu.pipeline_mode<synchronous>, transform_indices = @transform_7, window_bounds = array<i64: 1, 16>}, {transform_indices = @transform_8, window_bounds = array<i64: 1>}, {transform_indices = @transform_9, window_bounds = array<i64: 8, 1>}]} {
    %c0 = arith.constant 0 : index
    %c0_0 = arith.constant 0 : index
    %0 = vector.load %arg1[%c0, %c0_0] : memref<8x32xf32, #tpu.memory_space<vmem>>, vector<8x32xf32>
    %c0_1 = arith.constant 0 : index
    %c0_2 = arith.constant 0 : index
    %1 = vector.load %arg3[%c0_1, %c0_2] : memref<32x128xf32, #tpu.memory_space<vmem>>, vector<32x128xf32>
    %cst = arith.constant dense<0.000000e+00> : vector<8x128xf32>
    %2 = tpu.matmul %0, %1, %cst {dimension_numbers = #tpu.dot_dimension_numbers<[1], [0], [0], [1], [0, 0, 1, 1], [], []>} : vector<8x32xf32>, vector<32x128xf32>, vector<8x128xf32> -> vector<8x128xf32>
    %c0_3 = arith.constant 0 : index
    %c0_4 = arith.constant 0 : index
    %3 = vector.load %arg4[%c0_3, %c0_4] : memref<1x128xf32, #tpu.memory_space<vmem>>, vector<1x128xf32>
    %4 = vector.broadcast %3 : vector<1x128xf32> to vector<8x128xf32>
    %5 = arith.addf %2, %4 : vector<8x128xf32>
    %cst_5 = arith.constant 0.000000e+00 : f32
    %6 = vector.broadcast %cst_5 : f32 to vector<8x128xf32>
    %7 = arith.maximumf %5, %6 : vector<8x128xf32>
    %c0_6 = arith.constant 0 : index
    %c0_7 = arith.constant 0 : index
    %8 = vector.load %arg2[%c0_6, %c0_7] : memref<8x16xf32, #tpu.memory_space<vmem>>, vector<8x16xf32>
    %c0_8 = arith.constant 0 : index
    %c0_9 = arith.constant 0 : index
    %9 = vector.load %arg5[%c0_8, %c0_9] : memref<16x16xf32, #tpu.memory_space<vmem>>, vector<16x16xf32>
    %cst_10 = arith.constant dense<0.000000e+00> : vector<8x16xf32>
    %10 = tpu.matmul %8, %9, %cst_10 {dimension_numbers = #tpu.dot_dimension_numbers<[1], [0], [0], [1], [0, 0, 1, 1], [], []>} : vector<8x16xf32>, vector<16x16xf32>, vector<8x16xf32> -> vector<8x16xf32>
    %c0_11 = arith.constant 0 : index
    %c0_12 = arith.constant 0 : index
    %11 = vector.load %arg6[%c0_11, %c0_12] : memref<1x16xf32, #tpu.memory_space<vmem>>, vector<1x16xf32>
    %12 = vector.broadcast %11 : vector<1x16xf32> to vector<8x16xf32>
    %13 = arith.addf %10, %12 : vector<8x16xf32>
    %cst_13 = arith.constant 0.000000e+00 : f32
    %14 = vector.broadcast %cst_13 : f32 to vector<8x16xf32>
    %15 = arith.maximumf %13, %14 : vector<8x16xf32>
    %c0_14 = arith.constant 0 : index
    %c0_15 = arith.constant 0 : index
    %16 = vector.load %arg7[%c0_14, %c0_15] : memref<1x128xf32, #tpu.memory_space<vmem>>, vector<1x128xf32>
    %17 = vector.broadcast %16 : vector<1x128xf32> to vector<8x128xf32>
    %18 = arith.mulf %7, %17 : vector<8x128xf32>
    %cst_16 = arith.constant dense<0.000000e+00> : vector<8xf32>
    %19 = vector.multi_reduction <add>, %18, %cst_16 [1] : vector<8x128xf32> to vector<8xf32>
    %20 = vector.shape_cast %19 : vector<8xf32> to vector<8x1xf32>
    %c0_17 = arith.constant 0 : index
    %c0_18 = arith.constant 0 : index
    %21 = vector.load %arg8[%c0_17, %c0_18] : memref<1x16xf32, #tpu.memory_space<vmem>>, vector<1x16xf32>
    %22 = vector.broadcast %21 : vector<1x16xf32> to vector<8x16xf32>
    %23 = arith.mulf %15, %22 : vector<8x16xf32>
    %cst_19 = arith.constant dense<0.000000e+00> : vector<8xf32>
    %24 = vector.multi_reduction <add>, %23, %cst_19 [1] : vector<8x16xf32> to vector<8xf32>
    %25 = vector.shape_cast %24 : vector<8xf32> to vector<8x1xf32>
    %26 = arith.addf %20, %25 : vector<8x1xf32>
    %c0_20 = arith.constant 0 : index
    %27 = memref.load %arg9[%c0_20] : memref<1xf32, #tpu.memory_space<smem>>
    %28 = vector.broadcast %27 : f32 to vector<8x1xf32>
    %29 = arith.addf %26, %28 : vector<8x1xf32>
    %cst_21 = arith.constant 0.000000e+00 : f32
    %30 = vector.broadcast %cst_21 : f32 to vector<8x1xf32>
    %31 = arith.maximumf %29, %30 : vector<8x1xf32>
    %c0_22 = arith.constant 0 : index
    %c0_23 = arith.constant 0 : index
    %32 = vector.load %arg10[%c0_22, %c0_23] : memref<8x1xf32, #tpu.memory_space<vmem>>, vector<8x1xf32>
    tpu.vector_store %arg10[%c0_22, %c0_23], %31 {strides = array<i32>} : memref<8x1xf32, #tpu.memory_space<vmem>>, vector<8x1xf32>,
    return
  }
  func.func @transform_0(%arg0: i32) -> (i32, i32) {
    %c0_i32 = arith.constant 0 : i32
    %c0_i32_0 = arith.constant 0 : i32
    return %arg0, %c0_i32 : i32, i32
  }
  func.func @transform_1(%arg0: i32) -> (i32, i32) {
    %c0_i32 = arith.constant 0 : i32
    %c0_i32_0 = arith.constant 0 : i32
    return %arg0, %c0_i32 : i32, i32
  }
  func.func @transform_2(%arg0: i32) -> (i32, i32) {
    %c0_i32 = arith.constant 0 : i32
    %c0_i32_0 = arith.constant 0 : i32
    %c0_i32_1 = arith.constant 0 : i32
    return %c0_i32, %c0_i32_0 : i32, i32
  }
  func.func @transform_3(%arg0: i32) -> (i32, i32) {
    %c0_i32 = arith.constant 0 : i32
    %c0_i32_0 = arith.constant 0 : i32
    %c0_i32_1 = arith.constant 0 : i32
    return %c0_i32, %c0_i32_0 : i32, i32
  }
  func.func @transform_4(%arg0: i32) -> (i32, i32) {
    %c0_i32 = arith.constant 0 : i32
    %c0_i32_0 = arith.constant 0 : i32
    %c0_i32_1 = arith.constant 0 : i32
    return %c0_i32, %c0_i32_0 : i32, i32
  }
  func.func @transform_5(%arg0: i32) -> (i32, i32) {
    %c0_i32 = arith.constant 0 : i32
    %c0_i32_0 = arith.constant 0 : i32
    %c0_i32_1 = arith.constant 0 : i32
    return %c0_i32, %c0_i32_0 : i32, i32
  }
  func.func @transform_6(%arg0: i32) -> (i32, i32) {
    %c0_i32 = arith.constant 0 : i32
    %c0_i32_0 = arith.constant 0 : i32
    %c0_i32_1 = arith.constant 0 : i32
    return %c0_i32, %c0_i32_0 : i32, i32
  }
  func.func @transform_7(%arg0: i32) -> (i32, i32) {
    %c0_i32 = arith.constant 0 : i32
    %c0_i32_0 = arith.constant 0 : i32
    %c0_i32_1 = arith.constant 0 : i32
    return %c0_i32, %c0_i32_0 : i32, i32
  }
  func.func @transform_8(%arg0: i32) -> i32 {
    %c0_i32 = arith.constant 0 : i32
    %c0_i32_0 = arith.constant 0 : i32
    return %c0_i32 : i32
  }
  func.func @transform_9(%arg0: i32) -> (i32, i32) {
    %c0_i32 = arith.constant 0 : i32
    %c0_i32_0 = arith.constant 0 : i32
    return %arg0, %c0_i32 : i32, i32
  }
}

</mosaic_0001>

<llo_original>
// kernel: tpu_custom_call.1
$region0: #{tpu_custom_call.1}
  #allocation0 [shape = 'u32[]', space=smem, size = 0x4, offset = 0x4, fixed_abs, tag = 'smem constant byte address 0x4 - core index']
  #allocation1 [shape = 'u32[144,128]{1,0:T(1,128)}', space=vmem, size = 0x12000, scoped, tag = 'internal scratch']
  #allocation2 [shape = 'f32[1]{0:T(128)S(6)}', space=smem, size = 0x200, scoped, tag = 'scoped memory for tpu_custom_call.1']
  %s0 = inlined_call_operand.hbm [shape: f32[24,32], index: 0, kind: input, shape index: {}]
  %s1 = inlined_call_operand.vmem [shape: f32[24,16], index: 1, kind: input, shape index: {}]
  %s2 = inlined_call_operand.vmem [shape: f32[32,128], index: 2, kind: input, shape index: {}]
  %s3 = inlined_call_operand.vmem [shape: f32[1,128], index: 3, kind: input, shape index: {}]
  %s4 = inlined_call_operand.vmem [shape: f32[16,16], index: 4, kind: input, shape index: {}]
  %s5 = inlined_call_operand.vmem [shape: f32[1,16], index: 5, kind: input, shape index: {}]
  %s6 = inlined_call_operand.vmem [shape: f32[1,128], index: 6, kind: input, shape index: {}]
  %s7 = inlined_call_operand.vmem [shape: f32[1,16], index: 7, kind: input, shape index: {}]
  %s8 = inlined_call_operand.<no memory space> [shape: f32[1], index: 8, kind: input, shape index: {}]
  %s9 = inlined_call_operand.vmem [shape: f32[24,1], index: 9, kind: output, shape index: {}]
  %s10 = sld [smem:[#allocation0]]
  $region73: #{tpu_custom_call.1} parent=0
    _
  %s12 = ssub.s32 1, %s10
  %s13 = scalar_select 0, %s12, %s10
  %14 = sst [smem:[#allocation2]] %s8
  $region1: #{tpu_custom_call.1} parent=0
    #allocation3 [shape = 'u8[8192]{0}', space=vmem, size = 0x2000, scoped, tag = 'input window, operand 0']
    #allocation4 [shape = 's32[2]{0}', space=sflag, size = 0x8, scoped, tag = 'scoped memory for tpu_custom_call.1']
    %15 = vsyncpa [#allocation4], 0
    %s16 = scalar_lea.sflag [#allocation4], 1
    %17 = vsyncpa %s16, 0
    loop: start=0, step=1, limit=5
    $region2: #{tpu_custom_call.1} parent=1 // loop_pre_header
      _
    $region3: #{tpu_custom_call.1} parent=1 // loop_header
      %s19 = sphi 0, %s23
      %p20 = scmp.ge.s32.totalorder %s19, 5
      %s29 = sphi 0, %s31
      %s32 = sphi 0, %s29
      %s33 = sphi 0, %s32
      %s49 = sphi 0, %s33
      %s55 = sphi 0, %s57
      %s58 = sphi 0, %s55
      %s59 = sphi 0, %s58
      %s75 = sphi 0, %s59
      %s79 = sphi 0, %s79
      %s81 = sphi 0, %s79
      %s82 = sphi 0, %s81
      %s96 = sphi 0, %s82
      %s100 = sphi 0, %s100
      %s102 = sphi 0, %s100
      %s103 = sphi 0, %s102
      %s117 = sphi 0, %s103
      %s121 = sphi 0, %s121
      %s123 = sphi 0, %s121
      %s124 = sphi 0, %s123
      %s138 = sphi 0, %s124
      %s142 = sphi 0, %s142
      %s144 = sphi 0, %s142
      %s145 = sphi 0, %s144
      %s159 = sphi 0, %s145
      %s163 = sphi 0, %s163
      %s165 = sphi 0, %s163
      %s166 = sphi 0, %s165
      %s180 = sphi 0, %s166
      %s184 = sphi 0, %s184
      %s186 = sphi 0, %s184
      %s187 = sphi 0, %s186
      %s201 = sphi 0, %s187
      %s205 = sphi 0, %s205
      %s207 = sphi 0, %s205
      %s208 = sphi 0, %s207
      %s222 = sphi 0, %s208
      %s228 = sphi 0, %s230
      %s231 = sphi 0, %s228
      %s232 = sphi 0, %s231
      %s248 = sphi 0, %s232
    $region4: #{tpu_custom_call.1} parent=1 // loop_header_branch
      %22 = sbr.rel (%p20) target = $region8
    $region5: #{tpu_custom_call.1} parent=1 // loop_body
      %s24 = ssub.s32 %s19, 1
      %s25 = ssub.s32 %s19, 2
      %s26 = sadd.s32 %s19, 1
      %s27 = ssub.s32 %s19, %s26
      %p28 = scmp.eq.s32.totalorder %s27, 0
      %s30 = sadd.s32 %s29, 1
      %s31 = scalar_select %p28, %s29, %s30
      %p34 = pneg %p28
      %p35 = scmp.eq.s32.totalorder %s19, 2
      %p36 = por %p34, %p35
      %p37 = scmp.ne.s32.totalorder %s29, %s32
      %p38 = scmp.eq.s32.totalorder %s19, 0
      %p39 = por %p37, %p38
      %p40 = scmp.ne.s32.totalorder %s29, %s32
      %p41 = scmp.eq.s32.totalorder %s24, 2
      %p42 = por %p40, %p41
      %p43 = scmp.ne.s32.totalorder %s32, %s33
      %p44 = scmp.eq.s32.totalorder %s24, 0
      %p45 = por %p43, %p44
      %p46 = scmp.ne.s32.totalorder %s32, %s33
      %p47 = scmp.eq.s32.totalorder %s25, 2
      %p48 = por %p46, %p47
      %p50 = scmp.ne.s32.totalorder %s33, %s49
      %p51 = scmp.eq.s32.totalorder %s25, 0
      %p52 = por %p50, %p51
      %s53 = ssub.s32 %s19, %s26
      %p54 = scmp.eq.s32.totalorder %s53, 0
      %s56 = sadd.s32 %s55, 1
      %s57 = scalar_select %p54, %s55, %s56
      %p60 = pneg %p54
      %p61 = scmp.eq.s32.totalorder %s19, 2
      %p62 = por %p60, %p61
      %p63 = scmp.ne.s32.totalorder %s55, %s58
      %p64 = scmp.eq.s32.totalorder %s19, 0
      %p65 = por %p63, %p64
      %p66 = scmp.ne.s32.totalorder %s55, %s58
      %p67 = scmp.eq.s32.totalorder %s24, 2
      %p68 = por %p66, %p67
      %p69 = scmp.ne.s32.totalorder %s58, %s59
      %p70 = scmp.eq.s32.totalorder %s24, 0
      %p71 = por %p69, %p70
      %p72 = scmp.ne.s32.totalorder %s58, %s59
      %p73 = scmp.eq.s32.totalorder %s25, 2
      %p74 = por %p72, %p73
      %p76 = scmp.ne.s32.totalorder %s59, %s75
      %p77 = scmp.eq.s32.totalorder %s25, 0
      %p78 = por %p76, %p77
      %s80 = sadd.s32 %s79, 1
      %p83 = scmp.eq.s32.totalorder %s19, 2
      %p84 = scmp.ne.s32.totalorder %s79, %s81
      %p85 = scmp.eq.s32.totalorder %s19, 0
      %p86 = por %p84, %p85
      %p87 = scmp.ne.s32.totalorder %s79, %s81
      %p88 = scmp.eq.s32.totalorder %s24, 2
      %p89 = por %p87, %p88
      %p90 = scmp.ne.s32.totalorder %s81, %s82
      %p91 = scmp.eq.s32.totalorder %s24, 0
      %p92 = por %p90, %p91
      %p93 = scmp.ne.s32.totalorder %s81, %s82
      %p94 = scmp.eq.s32.totalorder %s25, 2
      %p95 = por %p93, %p94
      %p97 = scmp.ne.s32.totalorder %s82, %s96
      %p98 = scmp.eq.s32.totalorder %s25, 0
      %p99 = por %p97, %p98
      %s101 = sadd.s32 %s100, 1
      %p104 = scmp.eq.s32.totalorder %s19, 2
      %p105 = scmp.ne.s32.totalorder %s100, %s102
      %p106 = scmp.eq.s32.totalorder %s19, 0
      %p107 = por %p105, %p106
      %p108 = scmp.ne.s32.totalorder %s100, %s102
      %p109 = scmp.eq.s32.totalorder %s24, 2
      %p110 = por %p108, %p109
      %p111 = scmp.ne.s32.totalorder %s102, %s103
      %p112 = scmp.eq.s32.totalorder %s24, 0
      %p113 = por %p111, %p112
      %p114 = scmp.ne.s32.totalorder %s102, %s103
      %p115 = scmp.eq.s32.totalorder %s25, 2
      %p116 = por %p114, %p115
      %p118 = scmp.ne.s32.totalorder %s103, %s117
      %p119 = scmp.eq.s32.totalorder %s25, 0
      %p120 = por %p118, %p119
      %s122 = sadd.s32 %s121, 1
      %p125 = scmp.eq.s32.totalorder %s19, 2
      %p126 = scmp.ne.s32.totalorder %s121, %s123
      %p127 = scmp.eq.s32.totalorder %s19, 0
      %p128 = por %p126, %p127
      %p129 = scmp.ne.s32.totalorder %s121, %s123
      %p130 = scmp.eq.s32.totalorder %s24, 2
      %p131 = por %p129, %p130
      %p132 = scmp.ne.s32.totalorder %s123, %s124
      %p133 = scmp.eq.s32.totalorder %s24, 0
      %p134 = por %p132, %p133
      %p135 = scmp.ne.s32.totalorder %s123, %s124
      %p136 = scmp.eq.s32.totalorder %s25, 2
      %p137 = por %p135, %p136
      %p139 = scmp.ne.s32.totalorder %s124, %s138
      %p140 = scmp.eq.s32.totalorder %s25, 0
      %p141 = por %p139, %p140
      %s143 = sadd.s32 %s142, 1
      %p146 = scmp.eq.s32.totalorder %s19, 2
      %p147 = scmp.ne.s32.totalorder %s142, %s144
      %p148 = scmp.eq.s32.totalorder %s19, 0
      %p149 = por %p147, %p148
      %p150 = scmp.ne.s32.totalorder %s142, %s144
      %p151 = scmp.eq.s32.totalorder %s24, 2
      %p152 = por %p150, %p151
      %p153 = scmp.ne.s32.totalorder %s144, %s145
      %p154 = scmp.eq.s32.totalorder %s24, 0
      %p155 = por %p153, %p154
      %p156 = scmp.ne.s32.totalorder %s144, %s145
      %p157 = scmp.eq.s32.totalorder %s25, 2
      %p158 = por %p156, %p157
      %p160 = scmp.ne.s32.totalorder %s145, %s159
      %p161 = scmp.eq.s32.totalorder %s25, 0
      %p162 = por %p160, %p161
      %s164 = sadd.s32 %s163, 1
      %p167 = scmp.eq.s32.totalorder %s19, 2
      %p168 = scmp.ne.s32.totalorder %s163, %s165
      %p169 = scmp.eq.s32.totalorder %s19, 0
      %p170 = por %p168, %p169
      %p171 = scmp.ne.s32.totalorder %s163, %s165
      %p172 = scmp.eq.s32.totalorder %s24, 2
      %p173 = por %p171, %p172
      %p174 = scmp.ne.s32.totalorder %s165, %s166
      %p175 = scmp.eq.s32.totalorder %s24, 0
      %p176 = por %p174, %p175
      %p177 = scmp.ne.s32.totalorder %s165, %s166
      %p178 = scmp.eq.s32.totalorder %s25, 2
      %p179 = por %p177, %p178
      %p181 = scmp.ne.s32.totalorder %s166, %s180
      %p182 = scmp.eq.s32.totalorder %s25, 0
      %p183 = por %p181, %p182
      %s185 = sadd.s32 %s184, 1
      %p188 = scmp.eq.s32.totalorder %s19, 2
      %p189 = scmp.ne.s32.totalorder %s184, %s186
      %p190 = scmp.eq.s32.totalorder %s19, 0
      %p191 = por %p189, %p190
      %p192 = scmp.ne.s32.totalorder %s184, %s186
      %p193 = scmp.eq.s32.totalorder %s24, 2
      %p194 = por %p192, %p193
      %p195 = scmp.ne.s32.totalorder %s186, %s187
      %p196 = scmp.eq.s32.totalorder %s24, 0
      %p197 = por %p195, %p196
      %p198 = scmp.ne.s32.totalorder %s186, %s187
      %p199 = scmp.eq.s32.totalorder %s25, 2
      %p200 = por %p198, %p199
      %p202 = scmp.ne.s32.totalorder %s187, %s201
      %p203 = scmp.eq.s32.totalorder %s25, 0
      %p204 = por %p202, %p203
      %s206 = sadd.s32 %s205, 1
      %p209 = scmp.eq.s32.totalorder %s19, 2
      %p210 = scmp.ne.s32.totalorder %s205, %s207
      %p211 = scmp.eq.s32.totalorder %s19, 0
      %p212 = por %p210, %p211
      %p213 = scmp.ne.s32.totalorder %s205, %s207
      %p214 = scmp.eq.s32.totalorder %s24, 2
      %p215 = por %p213, %p214
      %p216 = scmp.ne.s32.totalorder %s207, %s208
      %p217 = scmp.eq.s32.totalorder %s24, 0
      %p218 = por %p216, %p217
      %p219 = scmp.ne.s32.totalorder %s207, %s208
      %p220 = scmp.eq.s32.totalorder %s25, 2
      %p221 = por %p219, %p220
      %p223 = scmp.ne.s32.totalorder %s208, %s222
      %p224 = scmp.eq.s32.totalorder %s25, 0
      %p225 = por %p223, %p224
      %s226 = ssub.s32 %s19, %s26
      %p227 = scmp.eq.s32.totalorder %s226, 0
      %s229 = sadd.s32 %s228, 1
      %s230 = scalar_select %p227, %s228, %s229
      %p233 = pneg %p227
      %p234 = scmp.eq.s32.totalorder %s19, 2
      %p235 = por %p233, %p234
      %p236 = scmp.ne.s32.totalorder %s228, %s231
      %p237 = scmp.eq.s32.totalorder %s19, 0
      %p238 = por %p236, %p237
      %p239 = scmp.ne.s32.totalorder %s228, %s231
      %p240 = scmp.eq.s32.totalorder %s24, 2
      %p241 = por %p239, %p240
      %p242 = scmp.ne.s32.totalorder %s231, %s232
      %p243 = scmp.eq.s32.totalorder %s24, 0
      %p244 = por %p242, %p243
      %p245 = scmp.ne.s32.totalorder %s231, %s232
      %p246 = scmp.eq.s32.totalorder %s25, 2
      %p247 = por %p245, %p246
      %p249 = scmp.ne.s32.totalorder %s232, %s248
      %p250 = scmp.eq.s32.totalorder %s25, 0
      %p251 = por %p249, %p250
      %p252 = scmp.le.s32.totalorder 1, %s19
      %p253 = scmp.lt.s32.totalorder %s19, 4
      %p254 = pnand %p252, %p253
      %p255 = pneg %p254
      // Predicated region
      $region9: #{tpu_custom_call.1} parent=5 // pred_check
        _
      $region10: #{tpu_custom_call.1} parent=5 // pred_check_branch
        %257 = sbr.rel (%p254) target = $region12
      $region11: #{tpu_custom_call.1} parent=5 // pred_region
        %s258 = ssub.s32 %s19, 1
        // Predicated region
        $region13: #{tpu_custom_call.1} parent=11 // pred_check
          %p259 = pneg %p92
        $region14: #{tpu_custom_call.1} parent=11 // pred_check_branch
          %261 = sbr.rel (%p259) target = $region16
        $region15: #{tpu_custom_call.1} parent=11 // pred_region
          _
        $region16: #{tpu_custom_call.1} parent=11 // pred_fallthru
          _
        // Predicated region
        $region17: #{tpu_custom_call.1} parent=11 // pred_check
          %p262 = pneg %p113
        $region18: #{tpu_custom_call.1} parent=11 // pred_check_branch
          %264 = sbr.rel (%p262) target = $region20
        $region19: #{tpu_custom_call.1} parent=11 // pred_region
          _
        $region20: #{tpu_custom_call.1} parent=11 // pred_fallthru
          _
        // Predicated region
        $region21: #{tpu_custom_call.1} parent=11 // pred_check
          %p265 = pneg %p134
        $region22: #{tpu_custom_call.1} parent=11 // pred_check_branch
          %267 = sbr.rel (%p265) target = $region24
        $region23: #{tpu_custom_call.1} parent=11 // pred_region
          _
        $region24: #{tpu_custom_call.1} parent=11 // pred_fallthru
          _
        // Predicated region
        $region25: #{tpu_custom_call.1} parent=11 // pred_check
          %p268 = pneg %p155
        $region26: #{tpu_custom_call.1} parent=11 // pred_check_branch
          %270 = sbr.rel (%p268) target = $region28
        $region27: #{tpu_custom_call.1} parent=11 // pred_region
          _
        $region28: #{tpu_custom_call.1} parent=11 // pred_fallthru
          _
        // Predicated region
        $region29: #{tpu_custom_call.1} parent=11 // pred_check
          %p271 = pneg %p176
        $region30: #{tpu_custom_call.1} parent=11 // pred_check_branch
          %273 = sbr.rel (%p271) target = $region32
        $region31: #{tpu_custom_call.1} parent=11 // pred_region
          _
        $region32: #{tpu_custom_call.1} parent=11 // pred_fallthru
          _
        // Predicated region
        $region33: #{tpu_custom_call.1} parent=11 // pred_check
          %p274 = pneg %p197
        $region34: #{tpu_custom_call.1} parent=11 // pred_check_branch
          %276 = sbr.rel (%p274) target = $region36
        $region35: #{tpu_custom_call.1} parent=11 // pred_region
          _
        $region36: #{tpu_custom_call.1} parent=11 // pred_fallthru
          _
        // Predicated region
        $region37: #{tpu_custom_call.1} parent=11 // pred_check
          %p277 = pneg %p218
        $region38: #{tpu_custom_call.1} parent=11 // pred_check_branch
          %279 = sbr.rel (%p277) target = $region40
        $region39: #{tpu_custom_call.1} parent=11 // pred_region
          _
        $region40: #{tpu_custom_call.1} parent=11 // pred_fallthru
          _
      $region12: #{tpu_custom_call.1} parent=5 // pred_fallthru
        _
      %p280 = scmp.lt.s32.totalorder %s19, 3
      // Predicated region
      $region41: #{tpu_custom_call.1} parent=5 // pred_check
        %p281 = pneg %p280
      $region42: #{tpu_custom_call.1} parent=5 // pred_check_branch
        %283 = sbr.rel (%p281) target = $region44
      $region43: #{tpu_custom_call.1} parent=5 // pred_region
        // Predicated region
        $region45: #{tpu_custom_call.1} parent=43 // pred_check
          %p284 = pneg %p39
        $region46: #{tpu_custom_call.1} parent=43 // pred_check_branch
          %286 = sbr.rel (%p284) target = $region48
        $region47: #{tpu_custom_call.1} parent=43 // pred_region
          %s287 = sand.u32 %s29, 1
          %s288 = scalar_lea.sflag [#allocation4], %s287
          %s289 = sand.u32 %s29, 1
          %s290 = smul.addr %s289, 8
          %s291 = scalar_lea.vmem [#allocation3], %s290
          %s293 = ssub.s32 128, 128
          %294 = vsyncadd %s288, %s293
          %s295 = smul.addr %s19, 128
          %s296 = scalar_lea.hbm %s0, %s295
          %s298 = sshll.u32 %s291, 4
          %s299 = int_to_ptr.vmem [resolvable:$true] %s298
          %301 = dma.hbm_to_vmem [thread:$0]  %s296, 128, %s299, %s288
        $region48: #{tpu_custom_call.1} parent=43 // pred_fallthru
          _
        // Predicated region
        $region49: #{tpu_custom_call.1} parent=43 // pred_check
          %p302 = pneg %p65
        $region50: #{tpu_custom_call.1} parent=43 // pred_check_branch
          %304 = sbr.rel (%p302) target = $region52
        $region51: #{tpu_custom_call.1} parent=43 // pred_region
          %p305 = scmp.lt.s32.totalorder %s19, 2
          %s306 = scalar_select %p305, %s19, 2
          %s307 = smul.addr %s306, 8
          %s308 = scalar_lea.vmem %s1, %s307
        $region52: #{tpu_custom_call.1} parent=43 // pred_fallthru
          _
      $region44: #{tpu_custom_call.1} parent=5 // pred_fallthru
        _
      %p309 = scmp.le.s32.totalorder 1, %s19
      %p310 = scmp.lt.s32.totalorder %s19, 4
      %p311 = pnand %p309, %p310
      %p312 = pneg %p311
      // Predicated region
      $region53: #{tpu_custom_call.1} parent=5 // pred_check
        _
      $region54: #{tpu_custom_call.1} parent=5 // pred_check_branch
        %314 = sbr.rel (%p311) target = $region56
      $region55: #{tpu_custom_call.1} parent=5 // pred_region
        %s315 = ssub.s32 %s19, 1
        %s316 = sand.u32 %s32, 1
        %s317 = scalar_lea.sflag [#allocation4], %s316
        %s318 = sand.u32 %s32, 1
        %s319 = smul.addr %s318, 8
        %s320 = scalar_lea.vmem [#allocation3], %s319
        // Predicated region
        $region57: #{tpu_custom_call.1} parent=55 // pred_check
          %p321 = pneg %p45
        $region58: #{tpu_custom_call.1} parent=55 // pred_check_branch
          %323 = sbr.rel (%p321) target = $region60
        $region59: #{tpu_custom_call.1} parent=55 // pred_region
          %324 = dma.done %s317, 128
        $region60: #{tpu_custom_call.1} parent=55 // pred_fallthru
          _
        %s325 = sand.u32 %s32, 1
        %s326 = scalar_lea.sflag [#allocation4], %s325
        %s327 = sand.u32 %s32, 1
        %s328 = smul.addr %s327, 8
        %s329 = scalar_lea.vmem [#allocation3], %s328
        %p330 = pneg %p45
        %p331 = pneg %p42
        %p332 = scmp.lt.s32.totalorder %s24, 2
        %s333 = scalar_select %p332, %s24, 2
        %s334 = smul.addr %s333, 8
        %s335 = scalar_lea.vmem %s1, %s334
        %p336 = pneg %p71
        %p337 = pneg %p68
        %p338 = pneg %p92
        %p339 = pneg %p89
        %p340 = pneg %p113
        %p341 = pneg %p110
        %p342 = pneg %p134
        %p343 = pneg %p131
        %p344 = pneg %p155
        %p345 = pneg %p152
        %p346 = pneg %p176
        %p347 = pneg %p173
        %p348 = pneg %p197
        %p349 = pneg %p194
        %p350 = pneg %p218
        %p351 = pneg %p215
        %p352 = pneg %p244
        %p353 = pneg %p241
        %p354 = scmp.lt.s32.totalorder %s24, 2
        %s355 = scalar_select %p354, %s24, 2
        %s356 = smul.addr %s355, 8
        %s357 = scalar_lea.vmem %s9, %s356
        %p358 = scmp.lt.s32.totalorder %s24, 2
        %s359 = scalar_select %p358, %s24, 2
        %s360 = smul.addr %s359, 8
        %s361 = scalar_lea.vmem %s1, %s360
        %p362 = scmp.lt.s32.totalorder %s24, 2
        %s363 = scalar_select %p362, %s24, 2
        %s364 = smul.addr %s363, 8
        %s365 = scalar_lea.vmem %s9, %s364
        %v366 = vld [vmem:[%s320] sm:$0xff]
        %v367 = vld [vmem:[%s2] sm:$0xff]
        %v368 = vld [vmem:[%s2 + $0x8] sm:$0xff]
        %v369 = vld [vmem:[%s2 + $0x10] sm:$0xff]
        %v370 = vld [vmem:[%s2 + $0x18] sm:$0xff]
        %v371 = vld [vmem:[%s3] sm:$0x1]
        %v373 = vlaneseq
        %v374 = vshrl.u32 %v373, 7
        %v375 = vsub.s32 0, %v374
        %v376 = vrot.slane %v371, %v375
        %vm378 = vcmask 261120
        %v380 = vsel %vm378, %v366, 0
        %382 = vmatprep.subr.mxu0 0.0
        %383 = vmatpush1.msra.mxu0 %v367
        %384 = vmatprep.subr.mxu0 0.0
        %385 = vmatpush1.msra.mxu0 %v368
        %386 = vmatprep.subr.mxu0 0.0
        %387 = vmatpush1.msra.mxu0 %v369
        %388 = vmatprep.subr.mxu0 0.0
        %389 = vmatpush1.msra.mxu0 %v370
        %390 = vmatprep.subr.mxu0 0.0
        %391 = vmatpush1.msra.mxu0 0.0
        %392 = vmatprep.subr.mxu0 0.0
        %393 = vmatpush1.msra.mxu0 0.0
        %394 = vmatprep.subr.mxu0 0.0
        %395 = vmatpush1.msra.mxu0 0.0
        %396 = vmatprep.subr.mxu0 0.0
        %397 = vmatpush1.msra.mxu0 0.0
        %398 = vmatprep.subr.mxu0 0.0
        %399 = vmatpush1.msra.mxu0 0.0
        %400 = vmatprep.subr.mxu0 0.0
        %401 = vmatpush1.msra.mxu0 0.0
        %402 = vmatprep.subr.mxu0 0.0
        %403 = vmatpush1.msra.mxu0 0.0
        %404 = vmatprep.subr.mxu0 0.0
        %405 = vmatpush1.msra.mxu0 0.0
        %406 = vmatprep.subr.mxu0 0.0
        %407 = vmatpush1.msra.mxu0 0.0
        %408 = vmatprep.subr.mxu0 0.0
        %409 = vmatpush1.msra.mxu0 0.0
        %410 = vmatprep.subr.mxu0 0.0
        %411 = vmatpush1.msra.mxu0 0.0
        %412 = vmatprep.subr.mxu0 0.0
        %413 = vmatpush1.msra.mxu0 0.0
        %414 = vmatprep.subr.mxu0 0.0
        %415 = vmatpush1.msra.mxu0 0.0
        %416 = vmatprep.subr.mxu0 0.0
        %417 = vmatpush1.msra.mxu0 0.0
        %418 = vmatprep.subr.mxu0 0.0
        %419 = vmatpush1.msra.mxu0 0.0
        %420 = vmatprep.subr.mxu0 0.0
        %421 = vmatpush1.msra.mxu0 0.0
        %422 = vmatprep.subr.mxu0 0.0
        %423 = vmatpush1.msra.mxu0 0.0
        %424 = vmatprep.subr.mxu0 0.0
        %425 = vmatpush1.msra.mxu0 0.0
        %426 = vmatprep.subr.mxu0 0.0
        %427 = vmatpush1.msra.mxu0 0.0
        %428 = vmatprep.subr.mxu0 0.0
        %429 = vmatpush1.msra.mxu0 0.0
        %430 = vmatprep.subr.mxu0 0.0
        %431 = vmatpush1.msra.mxu0 0.0
        %432 = vmatprep.subr.mxu0 0.0
        %433 = vmatpush1.msra.mxu0 0.0
        %434 = vmatprep.subr.mxu0 0.0
        %435 = vmatpush1.msra.mxu0 0.0
        %436 = vmatprep.subr.mxu0 0.0
        %437 = vmatpush1.msra.mxu0 0.0
        %438 = vmatprep.subr.mxu0 0.0
        %439 = vmatpush1.msra.mxu0 0.0
        %440 = vmatprep.subr.mxu0 0.0
        %441 = vmatpush1.msra.mxu0 0.0
        %442 = vmatprep.subr.mxu0 0.0
        %443 = vmatpush1.msra.mxu0 0.0
        %444 = vmatprep.subr.mxu0 0.0
        %445 = vmatpush1.msra.mxu0 0.0
        %446 = vmatprep.mubr.f32.mxu0 0.0
        %447 = vmatmul.mubr.f32.gmra.mrb[0].mxu0 %v380
        %v448 = vpop.f32.mrb[0].mxu0
        %v449 = vadd.f32 %v376, %v448
        %v450 = vpop.f32.mrb[0].mxu0
        %451 = vdwg.mxu0
        %v452 = vmax.f32 %v449, 0.0
        %v453 = vld [vmem:[%s361] sm:$0xff]
        %v454 = vld [vmem:[%s4] sm:$0xff]
        %v455 = vld [vmem:[%s4 + $0x8] sm:$0xff]
        %v456 = vld [vmem:[%s5] sm:$0x1]
        %v458 = vlaneseq
        %v459 = vshrl.u32 %v458, 7
        %v460 = vsub.s32 0, %v459
        %v461 = vrot.slane %v456, %v460
        %vm463 = vcmask 130048
        %v465 = vsel %vm463, %v453, 0
        %467 = vmatprep.subr.mxu0 0.0
        %468 = vmatpush1.msra.mxu0 %v454
        %469 = vmatprep.subr.mxu0 0.0
        %470 = vmatpush1.msra.mxu0 %v455
        %471 = vmatprep.subr.mxu0 0.0
        %472 = vmatpush1.msra.mxu0 0.0
        %473 = vmatprep.subr.mxu0 0.0
        %474 = vmatpush1.msra.mxu0 0.0
        %475 = vmatprep.subr.mxu0 0.0
        %476 = vmatpush1.msra.mxu0 0.0
        %477 = vmatprep.subr.mxu0 0.0
        %478 = vmatpush1.msra.mxu0 0.0
        %479 = vmatprep.subr.mxu0 0.0
        %480 = vmatpush1.msra.mxu0 0.0
        %481 = vmatprep.subr.mxu0 0.0
        %482 = vmatpush1.msra.mxu0 0.0
        %483 = vmatprep.subr.mxu0 0.0
        %484 = vmatpush1.msra.mxu0 0.0
        %485 = vmatprep.subr.mxu0 0.0
        %486 = vmatpush1.msra.mxu0 0.0
        %487 = vmatprep.subr.mxu0 0.0
        %488 = vmatpush1.msra.mxu0 0.0
        %489 = vmatprep.subr.mxu0 0.0
        %490 = vmatpush1.msra.mxu0 0.0
        %491 = vmatprep.subr.mxu0 0.0
        %492 = vmatpush1.msra.mxu0 0.0
        %493 = vmatprep.subr.mxu0 0.0
        %494 = vmatpush1.msra.mxu0 0.0
        %495 = vmatprep.subr.mxu0 0.0
        %496 = vmatpush1.msra.mxu0 0.0
        %497 = vmatprep.subr.mxu0 0.0
        %498 = vmatpush1.msra.mxu0 0.0
        %499 = vmatprep.subr.mxu0 0.0
        %500 = vmatpush1.msra.mxu0 0.0
        %501 = vmatprep.subr.mxu0 0.0
        %502 = vmatpush1.msra.mxu0 0.0
        %503 = vmatprep.subr.mxu0 0.0
        %504 = vmatpush1.msra.mxu0 0.0
        %505 = vmatprep.subr.mxu0 0.0
        %506 = vmatpush1.msra.mxu0 0.0
        %507 = vmatprep.subr.mxu0 0.0
        %508 = vmatpush1.msra.mxu0 0.0
        %509 = vmatprep.subr.mxu0 0.0
        %510 = vmatpush1.msra.mxu0 0.0
        %511 = vmatprep.subr.mxu0 0.0
        %512 = vmatpush1.msra.mxu0 0.0
        %513 = vmatprep.subr.mxu0 0.0
        %514 = vmatpush1.msra.mxu0 0.0
        %515 = vmatprep.subr.mxu0 0.0
        %516 = vmatpush1.msra.mxu0 0.0
        %517 = vmatprep.subr.mxu0 0.0
        %518 = vmatpush1.msra.mxu0 0.0
        %519 = vmatprep.subr.mxu0 0.0
        %520 = vmatpush1.msra.mxu0 0.0
        %521 = vmatprep.subr.mxu0 0.0
        %522 = vmatpush1.msra.mxu0 0.0
        %523 = vmatprep.subr.mxu0 0.0
        %524 = vmatpush1.msra.mxu0 0.0
        %525 = vmatprep.subr.mxu0 0.0
        %526 = vmatpush1.msra.mxu0 0.0
        %527 = vmatprep.subr.mxu0 0.0
        %528 = vmatpush1.msra.mxu0 0.0
        %529 = vmatprep.subr.mxu0 0.0
        %530 = vmatpush1.msra.mxu0 0.0
        %531 = vmatprep.mubr.f32.mxu0 0.0
        %532 = vmatmul.mubr.f32.gmra.mrb[0].mxu0 %v465
        %v533 = vpop.f32.mrb[0].mxu0
        %v534 = vadd.f32 %v461, %v533
        %v535 = vpop.f32.mrb[0].mxu0
        %536 = vdwg.mxu0
        %v537 = vmax.f32 %v534, 0.0
        %v538 = vld [vmem:[%s6] sm:$0x1]
        %v540 = vlaneseq
        %v541 = vshrl.u32 %v540, 7
        %v542 = vsub.s32 0, %v541
        %v543 = vrot.slane %v538, %v542
        %v545 = vmul.f32 %v452, %v543
        %546 = vadd.xlane.f32.xlu0 %v545
        %v547 = vpop.xlane.xlu0 %546
        %v548 = vld [vmem:[%s7] sm:$0x1]
        %v550 = vlaneseq
        %v551 = vshrl.u32 %v550, 7
        %v552 = vsub.s32 0, %v551
        %v553 = vrot.slane %v548, %v552
        %v555 = vmul.f32 %v537, %v553
        %v556 = vsel %vm463, %v555, 0.0
        %557 = vadd.xlane.f32.xlu0 %v556
        %v558 = vpop.xlane.xlu0 %557
        %v559 = vadd.f32 %v547, %v558
        %s560 = sld [smem:[#allocation2]]
        %v561 = vstv %s560
        %v562 = vadd.f32 %v559, %v561
        %v563 = vmax.f32 %v562, 0.0
        %vm564 = vcmask 7168
        %565 = vst.msk [vmem:[%s365] sm:$0xff] %vm564, %v563
        %p566 = scmp.lt.s32.totalorder %s24, 2
        %s567 = scalar_select %p566, %s24, 2
        %s568 = smul.addr %s567, 8
        %s569 = scalar_lea.vmem %s9, %s568
        // Predicated region
        $region61: #{tpu_custom_call.1} parent=55 // pred_check
          %p570 = pneg %p241
        $region62: #{tpu_custom_call.1} parent=55 // pred_check_branch
          %572 = sbr.rel (%p570) target = $region64
        $region63: #{tpu_custom_call.1} parent=55 // pred_region
          _
        $region64: #{tpu_custom_call.1} parent=55 // pred_fallthru
          _
      $region56: #{tpu_custom_call.1} parent=5 // pred_fallthru
        _
      %p573 = scmp.le.s32.totalorder 2, %s19
      // Predicated region
      $region65: #{tpu_custom_call.1} parent=5 // pred_check
        %p574 = pneg %p573
      $region66: #{tpu_custom_call.1} parent=5 // pred_check_branch
        %576 = sbr.rel (%p574) target = $region68
      $region67: #{tpu_custom_call.1} parent=5 // pred_region
        %s577 = ssub.s32 %s19, 2
        // Predicated region
        $region69: #{tpu_custom_call.1} parent=67 // pred_check
          %p578 = pneg %p247
        $region70: #{tpu_custom_call.1} parent=67 // pred_check_branch
          %580 = sbr.rel (%p578) target = $region72
        $region71: #{tpu_custom_call.1} parent=67 // pred_region
          %p581 = scmp.lt.s32.totalorder %s25, 2
          %s582 = scalar_select %p581, %s25, 2
          %s583 = smul.addr %s582, 8
          %s584 = scalar_lea.vmem %s9, %s583
        $region72: #{tpu_custom_call.1} parent=67 // pred_fallthru
          _
      $region68: #{tpu_custom_call.1} parent=5 // pred_fallthru
        _
    $region6: #{tpu_custom_call.1} parent=1 // loop_footer
      %s23 = sadd.s32 1, %s19
    $region7: #{tpu_custom_call.1} parent=1 // loop_footer_branch
      %18 = sbr.rel target = $region3
    $region8: #{tpu_custom_call.1} parent=1 // loop_exit
      _
    %585 = vsyncpa [#allocation4], 1
    %s586 = scalar_lea.sflag [#allocation4], 1
    %587 = vsyncpa %s586, 1

</llo_original>
